<compile_context>
chip_gen: v6e
topology: v6e:2x2x1
jax: 0.10.0
libtpu: 0.0.40
codegen_flags: <defaults>
</compile_context>

<pallas_src>
import jax
import jax.numpy as jnp
from jax import lax
from jax.experimental import pallas as pl
from jax.experimental.pallas import tpu as pltpu


# Per-chunk [rows, O*P*C] f32 element budget (a handful of vregs per live array).
_CHUNK_TARGET_ELEMS = 4096


def _vmem_config():
    """Returns (per-step input-tile byte budget, scoped-VMEM limit) per TPU gen."""
    try:
        cap = pltpu.get_tpu_info().vmem_capacity_bytes
    except Exception:
        cap = None
    if cap is None:
        # Unknown hardware: numbers that are safe on every generation.
        return 8 * 1024 * 1024, 48 * 1024 * 1024
    if cap <= 96 * 1024 * 1024:
        # v7x-class: only 64 MiB physical VMEM per TensorCore -> leave headroom.
        return 12 * 1024 * 1024, 48 * 1024 * 1024
    # v5e / v6e: 128 MiB physical VMEM.
    return 12 * 1024 * 1024, 64 * 1024 * 1024


def _make_kernel(*, s_total, ts, ch, spc, num_steps, num_orders, pc, has_weight):
    """Builds the streaming-reduction kernel for static problem parameters."""
    single_full = (num_steps == 1)  # ts == s_total: every row of the tile is valid

    def chunk_update(pred_ref, tgt_ref, w_ref, out_ref, start, nrows, rem):
        """out[1,1,O*PC] += sum over `nrows` tile rows of |pred_bcast - tgt| (*w)."""
        p = pred_ref[pl.ds(start, nrows), :].astype(jnp.float32)       # [nrows, PC]
        t = tgt_ref[pl.ds(start, nrows), :].astype(jnp.float32)        # [nrows, O*PC]
        # Lane-dense broadcast of pred across orders (O copies along lanes).
        pb = p if num_orders == 1 else jnp.concatenate([p] * num_orders, axis=-1)
        d = jnp.abs(pb - t)                                            # [nrows, O*PC]
        if has_weight:
            d = d * w_ref[pl.ds(start, nrows), :].astype(jnp.float32)
        if rem is not None:
            # Ragged tail: rows >= rem hold garbage (no zero-fill of partial
            # blocks) -> zero them before the reduction.
            rows = lax.broadcasted_iota(jnp.int32, (nrows, 1), 0)
            d = jnp.where(rows < rem, d, 0.0)
        # Row (sublane) reduce on the XLU, tiny VPU add into the resident block.
        out_ref[...] += jnp.sum(d, axis=0, keepdims=True)[None]

    def kernel(pred_ref, tgt_ref, *rest):
        if has_weight:
            w_ref, out_ref = rest
        else:
            w_ref = None
            (out_ref,) = rest

        i = pl.program_id(1)

        @pl.when(i == 0)
        def _init():
            out_ref[...] = jnp.zeros_like(out_ref)

        def full_chunk(c, carry):
            start = pl.multiple_of(c * ch, ch)
            chunk_update(pred_ref, tgt_ref, w_ref, out_ref, start, ch, None)
            return carry

        if single_full:
            # One grid step covering all of S: every row is valid, no masking.
            n_full = ts // ch
            tail = ts - n_full * ch
            if n_full > 0:
                lax.fori_loop(0, n_full, full_chunk, 0)
            if tail > 0:
                chunk_update(pred_ref, tgt_ref, w_ref, out_ref,
                             n_full * ch, tail, None)
        else:
            # Ragged grid over S (ts % ch == 0 by construction).
            c_id = pl.program_id(0)
            base = (c_id * spc + i) * ts
            valid = jnp.clip(s_total - base, 0, ts)   # real rows in this tile
            n_full = valid // ch
            lax.fori_loop(0, n_full, full_chunk, 0)
            rem = valid - n_full * ch

            @pl.when(rem > 0)
            def _tail():
                start = pl.multiple_of(n_full * ch, ch)
                chunk_update(pred_ref, tgt_ref, w_ref, out_ref, start, ch, rem)

    return kernel


def ordered_pts_l1_loss_pallas(pred, target, weight=None, avg_factor=None,
                               loss_weight=1.0, max_block_rows=None):
    """JAX/Pallas equivalent of OrderedPtsL1Loss.forward with reduction='mean'."""
    if avg_factor is None:
        raise ValueError('avg_factor should not be none for OrderedPtsL1Loss')
    S, O, P, C = target.shape
    assert pred.shape == (S, P, C), (pred.shape, target.shape)
    has_weight = weight is not None
    if has_weight:
        assert weight.shape == target.shape

    PC = P * C
    OPC = O * PC
    if S == 0 or OPC == 0:
        # TODO(synk): reference short-circuits to pred.sum()*0 for empty targets.
        return jnp.zeros((O,), jnp.float32)

    # Lane-dense, layout-preserving views (contiguous merges only, no HBM copy,
    # no dtype upcast -- the f32 cast happens inside the kernel after the DMA).
    pred2 = pred.reshape(S, PC)
    tgt2 = target.reshape(S, OPC)
    w2 = weight.reshape(S, OPC) if has_weight else None

    t_item = jnp.dtype(target.dtype).itemsize
    p_item = jnp.dtype(pred.dtype).itemsize
    w_item = jnp.dtype(weight.dtype).itemsize if has_weight else 0
    per_row_bytes = OPC * t_item + PC * p_item + OPC * w_item

    tile_budget, vmem_limit = _vmem_config()

    # Chunk rows: bounds the in-kernel f32 temporaries independently of the DMA
    # tile size (multiple of 8 sublanes).
    ch = max(8, min(512, ((_CHUNK_TARGET_ELEMS // max(OPC, 1)) // 8) * 8))

    ts_budget = max(1, tile_budget // max(per_row_bytes, 1))
    if max_block_rows is not None:
        ts_budget = min(ts_budget, max(1, int(max_block_rows)))

    if ts_budget >= S:
        ts = S
        num_steps = 1
    else:
        ch = min(ch, max(8, (ts_budget // 8) * 8))
        ts = max(ch, (ts_budget // ch) * ch)   # tile rows: multiple of ch
        if ts >= S:
            ts = S
            num_steps = 1
        else:
            num_steps = -(-S // ts)

    # Leading "parallel" axis: splits the S reduction across the 2 TensorCores
    # on v7x; pure bookkeeping on single-TC chips.
    nc = 2 if num_steps >= 2 else 1
    spc = -(-num_steps // nc)              # grid steps per core

    # Never let the (double-buffered) working set outrun the scoped-VMEM limit.
    tile_bytes = ts * per_row_bytes
    vmem_limit = max(vmem_limit, 2 * tile_bytes + (4 << 20))

    kernel = _make_kernel(s_total=S, ts=ts, ch=ch, spc=spc, num_steps=num_steps,
                          num_orders=O, pc=PC, has_weight=has_weight)

    last_block = num_steps - 1

    def row_map(c, i):
        # Steps past the end of S fetch the last real block; the kernel masks
        # them out entirely (valid == 0).
        return (jnp.minimum(c * spc + i, last_block), 0)

    in_specs = [
        pl.BlockSpec((ts, PC), row_map),    # pred tile
        pl.BlockSpec((ts, OPC), row_map),   # target tile
    ]
    operands = [pred2, tgt2]
    if has_weight:
        in_specs.append(pl.BlockSpec((ts, OPC), row_map))
        operands.append(w2)

    cost = pl.CostEstimate(
        flops=int(S * OPC * (4 if has_weight else 3)),
        transcendentals=0,
        bytes_accessed=int(S * OPC * t_item + S * PC * p_item
                           + S * OPC * w_item + nc * OPC * 4),
    )

    partial = pl.pallas_call(
        kernel,
        out_shape=jax.ShapeDtypeStruct((nc, 1, OPC), jnp.float32),
        grid=(nc, spc),
        in_specs=in_specs,
        out_specs=pl.BlockSpec((1, 1, OPC), lambda c, i: (c, 0, 0)),
        compiler_params=pltpu.CompilerParams(
            dimension_semantics=("parallel", "arbitrary"),
            vmem_limit_bytes=int(vmem_limit),
        ),
        cost_estimate=cost,
    )(*operands)

    # Tiny epilogue on the [nc, 1, O*P*C] partial sums: cross-core sum,
    # per-order reduce, and the loss_weight / avg_factor scaling.
    acc = jnp.sum(partial, axis=(0, 1))                 # [O*PC] f32
    per_order = acc.reshape(O, PC).sum(axis=-1)         # [O]
    scale = (jnp.asarray(loss_weight, jnp.float32) /
             jnp.asarray(avg_factor, jnp.float32))
    return per_order * scale


class OrderedPtsL1Loss:
    """Stateless JAX port of the PyTorch module (reduction='mean')."""

    def __init__(self, reduction='mean', loss_weight=1.0):
        assert reduction == 'mean'  # TODO(synk): 'none'/'sum' not implemented.
        self.reduction = reduction
        self.loss_weight = loss_weight

    def __call__(self, pred, target, weight=None, avg_factor=None,
                 reduction_override=None, max_block_rows=None):
        assert reduction_override in (None, 'mean')
        return ordered_pts_l1_loss_pallas(
            pred, target, weight=weight, avg_factor=avg_factor,
            loss_weight=self.loss_weight, max_block_rows=max_block_rows)


def _reference(pred, target, weight, avg_factor, loss_weight):
    """Pure-JAX mirror of the PyTorch forward for verification."""
    loss = jnp.abs(pred[:, None, :, :].astype(jnp.float32)
                   - target.astype(jnp.float32))            # [S, O, P, C]
    if weight is not None:
        loss = loss * weight.astype(jnp.float32)
    loss = jnp.transpose(loss, (1, 0, 2, 3))                 # [O, S, P, C]
    loss = loss.sum(axis=(1, 2, 3)) / avg_factor             # [O]
    return loss_weight * loss


if __name__ == "__main__":
    key = jax.random.PRNGKey(0)
    k = jax.random.split(key, 8)
    loss_weight = 2.5
    loss_fn = OrderedPtsL1Loss(reduction='mean', loss_weight=loss_weight)

    # ---- Test 1: weighted, f32, single grid step ------------------------------
    S, O, P, C = 2, 8, 8, 2
    pred = jax.random.normal(k[0], (S, P, C), jnp.float32)
    target = jax.random.normal(k[1], (S, O, P, C), jnp.float32)
    weight = (jax.random.uniform(k[2], (S, O, P, C)) > 0.3).astype(jnp.float32)
    avg_factor = float(S * P)
    out1 = jax.block_until_ready(
        loss_fn(pred, target, weight=weight, avg_factor=avg_factor))
    ref1 = _reference(pred, target, weight, avg_factor, loss_weight)
    assert out1.shape == (O,)
    assert jnp.allclose(out1, ref1, rtol=1e-5, atol=1e-5), (out1, ref1)

    # ---- Test 2: unweighted, f32, ragged multi-step grid + 2-row core split ---
    S, O, P, C = 40, 4, 16, 2
    pred = jax.random.normal(k[3], (S, P, C), jnp.float32)
    target = jax.random.normal(k[4], (S, O, P, C), jnp.float32)
    avg_factor = float(S * P)
    out2 = jax.block_until_ready(
        loss_fn(pred, target, weight=None, avg_factor=avg_factor,
                max_block_rows=16))
    ref2 = _reference(pred, target, None, avg_factor, loss_weight)
    assert out2.shape == (O,)
    assert jnp.allclose(out2, ref2, rtol=1e-5, atol=1e-5), (out2, ref2)

    # ---- Test 3: bf16 inputs, weighted, unaligned O*P*C, ragged tail ----------
    S, O, P, C = 19, 6, 20, 2
    pred = jax.random.normal(k[5], (S, P, C), jnp.bfloat16)
    target = jax.random.normal(k[6], (S, O, P, C), jnp.bfloat16)
    weight = (jax.random.uniform(k[7], (S, O, P, C)) > 0.25).astype(jnp.bfloat16)
    avg_factor = float(S * P)
    out3 = jax.block_until_ready(
        loss_fn(pred, target, weight=weight, avg_factor=avg_factor,
                max_block_rows=8))
    ref3 = _reference(pred, target, weight, avg_factor, loss_weight)
    assert out3.shape == (O,)
    assert jnp.allclose(out3, ref3, rtol=1e-4, atol=1e-4), (out3, ref3)

    print("KERNEL_OK")
</pallas_src>

<mosaic_0001>
module attributes {stable_mosaic.version = 11 : i64} {
  func.func @kernel(%arg0: i32, %arg1: i32, %arg2: memref<2x16xf32, #tpu.memory_space<vmem>>, %arg3: memref<2x128xf32, #tpu.memory_space<vmem>>, %arg4: memref<2x128xf32, #tpu.memory_space<vmem>>, %arg5: memref<1x1x128xf32, #tpu.memory_space<vmem>>) attributes {dimension_semantics = [#tpu.dimension_semantics<parallel>, #tpu.dimension_semantics<arbitrary>], iteration_bounds = array<i64: 1, 1>, scalar_prefetch = 0 : i64, scratch_operands = 0 : i64, tpu.core_type = #tpu.core_type<tc>, window_params = [{transform_indices = @transform_0, window_bounds = array<i64: 2, 16>}, {transform_indices = @transform_1, window_bounds = array<i64: 2, 128>}, {transform_indices = @transform_2, window_bounds = array<i64: 2, 128>}, {transform_indices = @transform_3, window_bounds = array<i64: 1, 1, 128>}]} {
    %c0_i32 = arith.constant 0 : i32
    %0 = arith.cmpi eq, %arg1, %c0_i32 : i32
    %1 = arith.extui %0 : i1 to i32
    %c0_i32_0 = arith.constant 0 : i32
    %2 = arith.cmpi ne, %1, %c0_i32_0 : i32
    scf.if %2 {
      %cst_12 = arith.constant 0.000000e+00 : f32
      %16 = vector.broadcast %cst_12 : f32 to vector<1x1x128xf32>
      %c0_13 = arith.constant 0 : index
      %c0_14 = arith.constant 0 : index
      %c0_15 = arith.constant 0 : index
      %17 = vector.load %arg5[%c0_13, %c0_14, %c0_15] : memref<1x1x128xf32, #tpu.memory_space<vmem>>, vector<1x1x128xf32>
      tpu.vector_store %arg5[%c0_13, %c0_14, %c0_15], %16 {strides = array<i32>} : memref<1x1x128xf32, #tpu.memory_space<vmem>>, vector<1x1x128xf32>,
    } else {
    }
    %c0 = arith.constant 0 : index
    %c0_1 = arith.constant 0 : index
    %3 = vector.load %arg2[%c0, %c0_1] : memref<2x16xf32, #tpu.memory_space<vmem>>, vector<2x16xf32>
    %c0_2 = arith.constant 0 : index
    %c0_3 = arith.constant 0 : index
    %4 = vector.load %arg3[%c0_2, %c0_3] : memref<2x128xf32, #tpu.memory_space<vmem>>, vector<2x128xf32>
    %5 = tpu.concatenate %3, %3, %3, %3, %3, %3, %3, %3 in 1 : vector<2x16xf32>, vector<2x16xf32>, vector<2x16xf32>, vector<2x16xf32>, vector<2x16xf32>, vector<2x16xf32>, vector<2x16xf32>, vector<2x16xf32> -> vector<2x128xf32>
    %6 = arith.subf %5, %4 : vector<2x128xf32>
    %7 = math.absf %6 : vector<2x128xf32>
    %c0_4 = arith.constant 0 : index
    %c0_5 = arith.constant 0 : index
    %8 = vector.load %arg4[%c0_4, %c0_5] : memref<2x128xf32, #tpu.memory_space<vmem>>, vector<2x128xf32>
    %9 = arith.mulf %7, %8 : vector<2x128xf32>
    %c0_6 = arith.constant 0 : index
    %c0_7 = arith.constant 0 : index
    %c0_8 = arith.constant 0 : index
    %10 = vector.load %arg5[%c0_6, %c0_7, %c0_8] : memref<1x1x128xf32, #tpu.memory_space<vmem>>, vector<1x1x128xf32>
    %cst = arith.constant dense<0.000000e+00> : vector<128xf32>
    %11 = vector.multi_reduction <add>, %9, %cst [0] : vector<2x128xf32> to vector<128xf32>
    %12 = vector.shape_cast %11 : vector<128xf32> to vector<1x128xf32>
    %13 = vector.shape_cast %12 : vector<1x128xf32> to vector<1x1x128xf32>
    %14 = arith.addf %10, %13 : vector<1x1x128xf32>
    %c0_9 = arith.constant 0 : index
    %c0_10 = arith.constant 0 : index
    %c0_11 = arith.constant 0 : index
    %15 = vector.load %arg5[%c0_9, %c0_10, %c0_11] : memref<1x1x128xf32, #tpu.memory_space<vmem>>, vector<1x1x128xf32>
    tpu.vector_store %arg5[%c0_9, %c0_10, %c0_11], %14 {strides = array<i32>} : memref<1x1x128xf32, #tpu.memory_space<vmem>>, vector<1x1x128xf32>,
    return
  }
  func.func @transform_0(%arg0: i32, %arg1: i32) -> (i32, i32) {
    %c1_i32 = arith.constant 1 : i32
    %0 = arith.muli %arg0, %c1_i32 : i32
    %1 = arith.addi %0, %arg1 : i32
    %c0_i32 = arith.constant 0 : i32
    %2 = arith.minsi %1, %c0_i32 : i32
    %c0_i32_0 = arith.constant 0 : i32
    %c0_i32_1 = arith.constant 0 : i32
    return %2, %c0_i32_0 : i32, i32
  }
  func.func @transform_1(%arg0: i32, %arg1: i32) -> (i32, i32) {
    %c1_i32 = arith.constant 1 : i32
    %0 = arith.muli %arg0, %c1_i32 : i32
    %1 = arith.addi %0, %arg1 : i32
    %c0_i32 = arith.constant 0 : i32
    %2 = arith.minsi %1, %c0_i32 : i32
    %c0_i32_0 = arith.constant 0 : i32
    %c0_i32_1 = arith.constant 0 : i32
    return %2, %c0_i32_0 : i32, i32
  }
  func.func @transform_2(%arg0: i32, %arg1: i32) -> (i32, i32) {
    %c1_i32 = arith.constant 1 : i32
    %0 = arith.muli %arg0, %c1_i32 : i32
    %1 = arith.addi %0, %arg1 : i32
    %c0_i32 = arith.constant 0 : i32
    %2 = arith.minsi %1, %c0_i32 : i32
    %c0_i32_0 = arith.constant 0 : i32
    %c0_i32_1 = arith.constant 0 : i32
    return %2, %c0_i32_0 : i32, i32
  }
  func.func @transform_3(%arg0: i32, %arg1: i32) -> (i32, i32, i32) {
    %c0_i32 = arith.constant 0 : i32
    %c0_i32_0 = arith.constant 0 : i32
    %c0_i32_1 = arith.constant 0 : i32
    return %arg0, %c0_i32, %c0_i32_0 : i32, i32, i32
  }
}

</mosaic_0001>

<llo_original>
// kernel: tpu_custom_call.1
$region0: #{tpu_custom_call.1}
  #allocation0 [shape = 'u32[]', space=smem, size = 0x4, offset = 0x4, fixed_abs, tag = 'smem constant byte address 0x4 - core index']
  #allocation1 [shape = 'u32[144,128]{1,0:T(1,128)}', space=vmem, size = 0x12000, scoped, tag = 'internal scratch']
  %s0 = inlined_call_operand.hbm [shape: f32[2,16], index: 0, kind: input, shape index: {}]
  %s1 = inlined_call_operand.hbm [shape: f32[2,128], index: 1, kind: input, shape index: {}]
  %s2 = inlined_call_operand.vmem [shape: f32[2,128], index: 2, kind: input, shape index: {}]
  %s3 = inlined_call_operand.hbm [shape: f32[1,1,128], index: 3, kind: output, shape index: {}]
  %s4 = sld [smem:[#allocation0]]
  $region34: #{tpu_custom_call.1} parent=0
    _
  %s6 = ssub.s32 1, %s4
  %s7 = scalar_select 0, %s6, %s4
  $region1: #{tpu_custom_call.1} parent=0
    #allocation2 [shape = 'u8[1024]{0}', space=vmem, size = 0x400, scoped, tag = 'input window, operand 0, single buffered']
    #allocation3 [shape = 's32[1]{0}', space=sflag, size = 0x4, scoped, tag = 'scoped memory for tpu_custom_call.1']
    #allocation4 [shape = 's32[1]{0}', space=sflag, size = 0x4, scoped, tag = 'scoped memory for tpu_custom_call.1']
    #allocation5 [shape = 'u8[1024]{0}', space=vmem, size = 0x400, scoped, tag = 'input window, operand 1, single buffered']
    #allocation6 [shape = 's32[1]{0}', space=sflag, size = 0x4, scoped, tag = 'scoped memory for tpu_custom_call.1']
    #allocation7 [shape = 'u8[512]{0}', space=vmem, size = 0x400, scoped, tag = 'output window, operand 0, single buffered']
    %8 = vsyncpa [#allocation3], 0
    %9 = vsyncpa [#allocation6], 0
    %10 = vsyncpa [#allocation4], 0
    // Predicated region
    $region2: #{tpu_custom_call.1} parent=1 // pred_check
      _
    $region3: #{tpu_custom_call.1} parent=1 // pred_check_branch
      %12 = sbr.rel (0) target = $region5
    $region4: #{tpu_custom_call.1} parent=1 // pred_region
      %s13 = sadd.s32 0, 0
      %p14 = scmp.lt.s32.totalorder %s13, 0
      %s15 = scalar_select %p14, %s13, 0
      %s17 = ssub.s32 32, 32
      %18 = vsyncadd [#allocation3], %s17
      %s19 = smul.addr %s15, 32
      %s20 = scalar_lea.hbm %s0, %s19
      %s22 = sshll.u32 [#allocation2], 4
      %s23 = int_to_ptr.vmem [resolvable:$true] %s22
      %25 = dma.hbm_to_vmem [thread:$0]  %s20, 32, %s23, [#allocation3]
    $region5: #{tpu_custom_call.1} parent=1 // pred_fallthru
      _
    // Predicated region
    $region6: #{tpu_custom_call.1} parent=1 // pred_check
      _
    $region7: #{tpu_custom_call.1} parent=1 // pred_check_branch
      %27 = sbr.rel (0) target = $region9
    $region8: #{tpu_custom_call.1} parent=1 // pred_region
      %s28 = sadd.s32 0, 0
      %p29 = scmp.lt.s32.totalorder %s28, 0
      %s30 = scalar_select %p29, %s28, 0
      %s32 = ssub.s32 32, 32
      %33 = vsyncadd [#allocation6], %s32
      %s34 = smul.addr %s30, 32
      %s35 = scalar_lea.hbm %s1, %s34
      %s37 = sshll.u32 [#allocation5], 4
      %s38 = int_to_ptr.vmem [resolvable:$true] %s37
      %40 = dma.hbm_to_vmem [thread:$0]  %s35, 32, %s38, [#allocation6]
    $region9: #{tpu_custom_call.1} parent=1 // pred_fallthru
      _
    // Predicated region
    $region10: #{tpu_custom_call.1} parent=1 // pred_check
      _
    $region11: #{tpu_custom_call.1} parent=1 // pred_check_branch
      %42 = sbr.rel (0) target = $region13
    $region12: #{tpu_custom_call.1} parent=1 // pred_region
      %s43 = sadd.s32 0, 0
      %p44 = scmp.lt.s32.totalorder %s43, 0
      %s45 = scalar_select %p44, %s43, 0
      %p46 = scmp.lt.s32.totalorder %s45, 0
      %s47 = scalar_select %p46, %s45, 0
      %s48 = smul.addr %s47, 2
      %s49 = scalar_lea.vmem %s2, %s48
      %s50 = sadd.s32 0, 0
      %p51 = scmp.lt.s32.totalorder %s50, 0
      %s52 = scalar_select %p51, %s50, 0
    $region13: #{tpu_custom_call.1} parent=1 // pred_fallthru
      _
    // Predicated region
    $region14: #{tpu_custom_call.1} parent=1 // pred_check
      _
    $region15: #{tpu_custom_call.1} parent=1 // pred_check_branch
      %54 = sbr.rel (0) target = $region17
    $region16: #{tpu_custom_call.1} parent=1 // pred_region
      %55 = dma.done [#allocation3], 32
    $region17: #{tpu_custom_call.1} parent=1 // pred_fallthru
      _
    // Predicated region
    $region18: #{tpu_custom_call.1} parent=1 // pred_check
      _
    $region19: #{tpu_custom_call.1} parent=1 // pred_check_branch
      %57 = sbr.rel (0) target = $region21
    $region20: #{tpu_custom_call.1} parent=1 // pred_region
      %58 = dma.done [#allocation6], 32
    $region21: #{tpu_custom_call.1} parent=1 // pred_fallthru
      _
    %s59 = sadd.s32 0, 0
    %p60 = scmp.lt.s32.totalorder %s59, 0
    %s61 = scalar_select %p60, %s59, 0
    %p62 = scmp.lt.s32.totalorder %s61, 0
    %s63 = scalar_select %p62, %s61, 0
    %s64 = smul.addr %s63, 2
    %s65 = scalar_lea.vmem %s2, %s64
    %s66 = sadd.s32 0, 0
    %p67 = scmp.lt.s32.totalorder %s66, 0
    %s68 = scalar_select %p67, %s66, 0
    %s69 = sadd.s32 0, 0
    %p70 = scmp.lt.s32.totalorder %s69, 0
    %s71 = scalar_select %p70, %s69, 0
    %s72 = sadd.s32 0, 0
    %p73 = scmp.lt.s32.totalorder %s72, 0
    %s74 = scalar_select %p73, %s72, 0
    %p75 = scmp.lt.s32.totalorder %s74, 0
    %s76 = scalar_select %p75, %s74, 0
    %s77 = smul.addr %s76, 2
    %s78 = scalar_lea.vmem %s2, %s77
    %s79 = sadd.s32 0, 0
    %p80 = scmp.lt.s32.totalorder %s79, 0
    %s81 = scalar_select %p80, %s79, 0
    %p82 = scmp.eq.s32.totalorder 0, 0
    // Predicated region
    $region22: #{tpu_custom_call.1} parent=1 // pred_check
      %p83 = pneg %p82
    $region23: #{tpu_custom_call.1} parent=1 // pred_check_branch
      %85 = sbr.rel (%p83) target = $region25
    $region24: #{tpu_custom_call.1} parent=1 // pred_region
      %86 = vst [vmem:[#allocation7] sm:$0x1] 0.0
    $region25: #{tpu_custom_call.1} parent=1 // pred_fallthru
      _
    %v87 = vld [vmem:[#allocation2] sm:$0x3]
    %v88 = vld [vmem:[#allocation5] sm:$0x3]
    %90 = vrot.lane.b32.xlu0 %v87, 16
    %v91 = vpop.permute.xlu0 %90
    %93 = vrot.lane.b32.xlu0 %v87, 32
    %v94 = vpop.permute.xlu0 %93
    %96 = vrot.lane.b32.xlu0 %v87, 48
    %v97 = vpop.permute.xlu0 %96
    %99 = vrot.lane.b32.xlu0 %v87, 64
    %v100 = vpop.permute.xlu0 %99
    %102 = vrot.lane.b32.xlu0 %v87, 80
    %v103 = vpop.permute.xlu0 %102
    %105 = vrot.lane.b32.xlu0 %v87, 96
    %v106 = vpop.permute.xlu0 %105
    %108 = vrot.lane.b32.xlu0 %v87, 112
    %v109 = vpop.permute.xlu0 %108
    %vm111 = vcmask 130048
    %v112 = vsel %vm111, %v87, %v91
    %vm113 = vcmask 261120
    %v114 = vsel %vm113, %v112, %v94
    %vm115 = vcmask 392192
    %v116 = vsel %vm115, %v114, %v97
    %vm117 = vcmask 523264
    %v118 = vsel %vm117, %v116, %v100
    %vm119 = vcmask 654336
    %v120 = vsel %vm119, %v118, %v103
    %vm121 = vcmask 785408
    %v122 = vsel %vm121, %v120, %v106
    %vm123 = vcmask 916480
    %v124 = vsel %vm123, %v122, %v109
    %v125 = vsub.f32 %v124, %v88
    %v126 = vand.u32 2147483647, %v125
    %v127 = vld [vmem:[%s78] sm:$0x3]
    %v128 = vmul.f32 %v126, %v127
    %v129 = vld [vmem:[#allocation7] sm:$0x1]
    %vm130 = vcmask 1041408
    %v131 = vsel %vm130, %v128, 0.0
    %v132 = vrot.slane %v131, 4
    %v133 = vadd.f32 %v131, %v132
    %v134 = vrot.slane %v133, 2
    %v135 = vadd.f32 %v133, %v134
    %v136 = vrot.slane %v135, 1
    %v137 = vadd.f32 %v135, %v136
    %v138 = vadd.f32 %v129, %v137
    %139 = vst [vmem:[#allocation7] sm:$0x1] %v138
    // Predicated region
    $region26: #{tpu_custom_call.1} parent=1 // pred_check
      _
    $region27: #{tpu_custom_call.1} parent=1 // pred_check_branch
      %141 = sbr.rel (0) target = $region29
    $region28: #{tpu_custom_call.1} parent=1 // pred_region
      %s143 = ssub.s32 16, 16
      %144 = vsyncadd [#allocation4], %s143
      %s146 = sshll.u32 [#allocation7], 4
      %s147 = int_to_ptr.vmem [resolvable:$true] %s146
      %149 = dma.vmem_to_hbm [thread:$0]  %s147, 16, %s3, [#allocation4]
    $region29: #{tpu_custom_call.1} parent=1 // pred_fallthru
      _
    // Predicated region
    $region30: #{tpu_custom_call.1} parent=1 // pred_check
      _
    $region31: #{tpu_custom_call.1} parent=1 // pred_check_branch
      %151 = sbr.rel (0) target = $region33
    $region32: #{tpu_custom_call.1} parent=1 // pred_region
      %152 = dma.done [#allocation4], 16
    $region33: #{tpu_custom_call.1} parent=1 // pred_fallthru
      _
    %153 = vsyncpa [#allocation3], 1
    %154 = vsyncpa [#allocation6], 1
    %155 = vsyncpa [#allocation4], 1

</llo_original>
